<compile_context>
chip_gen: v7x
topology: tpu7x:2x2x1
jax: 0.10.0
libtpu: 0.0.40
codegen_flags: <defaults>
</compile_context>

<pallas_src>
import math

import jax
import jax.numpy as jnp
from jax.experimental import pallas as pl
from jax.experimental.pallas import tpu as pltpu


# ----------------------------------------------------------------------------
# Fused SwiGLU FFN kernel: out = (silu(x@W1) * (x@W3 + b3)) @ W2 + b2
# Grid: (token tiles [parallel], hidden tiles [arbitrary/reduction]).
# ----------------------------------------------------------------------------
def ffn_kernel(x_ref, w1_ref, w3_ref, b3_ref, w2_ref, b2_ref, o_ref, acc_ref):
    h_idx = pl.program_id(1)

    @pl.when(h_idx == 0)
    def _():
        acc_ref[...] = jnp.zeros_like(acc_ref)

    x = x_ref[...]  # bf16 tile, fed straight to the MXU (no per-tile cast)

    h1 = jnp.dot(x, w1_ref[...], preferred_element_type=jnp.float32)
    h3 = jnp.dot(x, w3_ref[...], preferred_element_type=jnp.float32) + b3_ref[...]

    # SiLU + gating in f32: exp on the EUP, divide replaced by EUP approx
    # reciprocal — keeps VALU slots free and stays off bf16 VPU (v5e-safe).
    gate = h1 * pl.reciprocal(1.0 + jnp.exp(-h1), approx=True)
    hidden_act = (gate * h3).astype(w2_ref.dtype)

    acc_ref[...] += jnp.dot(hidden_act, w2_ref[...],
                            preferred_element_type=jnp.float32)

    @pl.when(h_idx == pl.num_programs(1) - 1)
    def _():
        o_ref[...] = (acc_ref[...] + b2_ref[...]).astype(o_ref.dtype)


def _vmem_limit_bytes():
    # Size the scoped-VMEM budget per generation (~80% of physical capacity):
    # ~100 MiB on v5e/v6e (128 MiB), ~50 MiB on v7x (64 MiB).
    try:
        return int(pltpu.get_tpu_info().vmem_capacity_bytes * 0.8)
    except Exception:
        return 64 << 20


def feed_forward(x, params, *, block_m=512, block_h=512):
    """x: (..., dim). params already prepared (bf16 weights, f32 biases)."""
    w1, w3, b3, w2, b2 = params
    orig_shape = x.shape
    dim = orig_shape[-1]
    hidden = w1.shape[1]
    M = math.prod(orig_shape[:-1])
    act_dtype = w1.dtype  # bf16

    # Activations move as bf16 (half the DMA bytes / VMEM of f32).
    x2d = x.reshape(M, dim).astype(act_dtype)

    block_m = min(block_m, M)
    block_h = min(block_h, hidden)
    # TODO(synk): pad/mask ragged token counts instead of asserting.
    assert M % block_m == 0, "token count must be divisible by block_m"
    assert hidden % block_h == 0, "hidden dim must be divisible by block_h"
    grid_m = M // block_m
    grid_h = hidden // block_h

    # Advisory cost hint so XLA schedules surrounding HLO sensibly.
    flops = int(6 * M * dim * hidden)             # three M x dim x hidden matmuls
    transcendentals = int(M * hidden)             # exp in SiLU
    bytes_accessed = int(
        (w1.size + w3.size + w2.size) * 2 * grid_m   # bf16 weights, re-streamed per token tile
        + (b3.size + b2.size) * 4 * grid_m
        + (x2d.size + M * dim) * 2                   # bf16 activations in + out
    )

    out = pl.pallas_call(
        ffn_kernel,
        out_shape=jax.ShapeDtypeStruct((M, dim), act_dtype),  # bf16 writeback
        grid=(grid_m, grid_h),
        in_specs=[
            pl.BlockSpec((block_m, dim),  lambda i, h: (i, 0)),  # x tile (constant over h)
            pl.BlockSpec((dim, block_h),  lambda i, h: (0, h)),  # W1 column slice
            pl.BlockSpec((dim, block_h),  lambda i, h: (0, h)),  # W3 column slice
            pl.BlockSpec((1, block_h),    lambda i, h: (0, h)),  # b3 slice
            pl.BlockSpec((block_h, dim),  lambda i, h: (h, 0)),  # W2 row slice
            pl.BlockSpec((1, dim),        lambda i, h: (0, 0)),  # b2
        ],
        out_specs=pl.BlockSpec((block_m, dim), lambda i, h: (i, 0)),
        scratch_shapes=[pltpu.VMEM((block_m, dim), jnp.float32)],  # f32 accumulator
        compiler_params=pltpu.CompilerParams(
            dimension_semantics=("parallel", "arbitrary"),
            vmem_limit_bytes=_vmem_limit_bytes(),
        ),
        cost_estimate=pl.CostEstimate(
            flops=flops,
            transcendentals=transcendentals,
            bytes_accessed=bytes_accessed,
        ),
    )(x2d, w1, w3, b3, w2, b2)

    return out.reshape(orig_shape)


# ----------------------------------------------------------------------------
# Parameter init matching torch.nn.Linear defaults: U(-1/sqrt(fan_in), +..).
# Weights are stored transposed (in, out) so the kernel computes h @ W + b.
# ----------------------------------------------------------------------------
def make_ffn_params(key, dim, hidden_dim, multiple_of, ffn_dim_multiplier=None):
    hidden = int(2 * hidden_dim / 3)
    if ffn_dim_multiplier is not None:
        hidden = int(ffn_dim_multiplier * hidden)
    hidden = multiple_of * ((hidden + multiple_of - 1) // multiple_of)

    k1, k2, k3, k4, k5 = jax.random.split(key, 5)
    bnd_in = 1.0 / math.sqrt(dim)
    bnd_hid = 1.0 / math.sqrt(hidden)
    w1 = jax.random.uniform(k1, (dim, hidden), jnp.float32, -bnd_in, bnd_in)   # bias=False
    w3 = jax.random.uniform(k2, (dim, hidden), jnp.float32, -bnd_in, bnd_in)
    b3 = jax.random.uniform(k3, (1, hidden), jnp.float32, -bnd_in, bnd_in)
    w2 = jax.random.uniform(k4, (hidden, dim), jnp.float32, -bnd_hid, bnd_hid)
    b2 = jax.random.uniform(k5, (1, dim), jnp.float32, -bnd_hid, bnd_hid)
    return (w1, w3, b3, w2, b2), hidden


def prepare_ffn_params(params, param_dtype=jnp.bfloat16):
    """One-time conversion: bf16 weights for streaming, f32 biases for the epilogue."""
    w1, w3, b3, w2, b2 = params
    return (w1.astype(param_dtype), w3.astype(param_dtype),
            b3.astype(jnp.float32),
            w2.astype(param_dtype), b2.astype(jnp.float32))


def ref_forward(x, params):
    w1, w3, b3, w2, b2 = params
    h = x.reshape(-1, x.shape[-1]).astype(jnp.float32)
    h1 = h @ w1
    h3 = h @ w3 + b3
    silu = h1 * (1.0 / (1.0 + jnp.exp(-h1)))
    out = (silu * h3) @ w2 + b2
    return out.reshape(x.shape)


if __name__ == "__main__":
    key = jax.random.PRNGKey(0)
    kx, kp = jax.random.split(key)

    batch, seq, dim = 2, 8, 128
    hidden_dim_arg, multiple_of = 4 * dim, 128      # -> hidden = 384

    params_f32, hidden = make_ffn_params(kp, dim, hidden_dim_arg, multiple_of, None)
    params = prepare_ffn_params(params_f32)         # bf16 cast done ONCE, outside the call
    x = jax.random.normal(kx, (batch, seq, dim), jnp.float32)

    # grid = (1 token tile, 3 hidden tiles) -> exercises the f32 accumulator path.
    out = feed_forward(x, params, block_m=16, block_h=128)
    out = jax.block_until_ready(out)

    expected = ref_forward(x, params_f32)
    assert out.shape == (batch, seq, dim), out.shape
    # bf16 weights/activations/output + f32 accumulation vs. pure-f32 reference.
    err = float(jnp.max(jnp.abs(out.astype(jnp.float32) - expected)))
    assert jnp.allclose(out.astype(jnp.float32), expected, rtol=3e-2, atol=3e-2), err

    print("KERNEL_OK")
</pallas_src>

<mosaic_0001>
module attributes {stable_mosaic.version = 11 : i64} {
  func.func @ffn_kernel(%arg0: i32, %arg1: i32, %arg2: memref<16x128xbf16, #tpu.memory_space<vmem>>, %arg3: memref<128x128xbf16, #tpu.memory_space<vmem>>, %arg4: memref<128x128xbf16, #tpu.memory_space<vmem>>, %arg5: memref<1x128xf32, #tpu.memory_space<vmem>>, %arg6: memref<128x128xbf16, #tpu.memory_space<vmem>>, %arg7: memref<1x128xf32, #tpu.memory_space<vmem>>, %arg8: memref<16x128xbf16, #tpu.memory_space<vmem>>, %arg9: memref<16x128xf32, #tpu.memory_space<vmem>>) attributes {dimension_semantics = [#tpu.dimension_semantics<parallel>, #tpu.dimension_semantics<arbitrary>], iteration_bounds = array<i64: 1, 3>, scalar_prefetch = 0 : i64, scratch_operands = 1 : i64, tpu.core_type = #tpu.core_type<tc>, window_params = [{transform_indices = @transform_0, window_bounds = array<i64: 16, 128>}, {transform_indices = @transform_1, window_bounds = array<i64: 128, 128>}, {transform_indices = @transform_2, window_bounds = array<i64: 128, 128>}, {transform_indices = @transform_3, window_bounds = array<i64: 1, 128>}, {transform_indices = @transform_4, window_bounds = array<i64: 128, 128>}, {pipeline_mode = #tpu.pipeline_mode<synchronous>, transform_indices = @transform_5, window_bounds = array<i64: 1, 128>}, {transform_indices = @transform_6, window_bounds = array<i64: 16, 128>}]} {
    %c0_i32 = arith.constant 0 : i32
    %0 = arith.cmpi eq, %arg1, %c0_i32 : i32
    %1 = arith.extui %0 : i1 to i32
    %c0_i32_0 = arith.constant 0 : i32
    %2 = arith.cmpi ne, %1, %c0_i32_0 : i32
    scf.if %2 {
      %cst_19 = arith.constant 0.000000e+00 : f32
      %28 = vector.broadcast %cst_19 : f32 to vector<16x128xf32>
      %c0_20 = arith.constant 0 : index
      %c0_21 = arith.constant 0 : index
      %29 = vector.load %arg9[%c0_20, %c0_21] : memref<16x128xf32, #tpu.memory_space<vmem>>, vector<16x128xf32>
      tpu.vector_store %arg9[%c0_20, %c0_21], %28 {strides = array<i32>} : memref<16x128xf32, #tpu.memory_space<vmem>>, vector<16x128xf32>,
    } else {
    }
    %c0 = arith.constant 0 : index
    %c0_1 = arith.constant 0 : index
    %3 = vector.load %arg2[%c0, %c0_1] : memref<16x128xbf16, #tpu.memory_space<vmem>>, vector<16x128xbf16>
    %c0_2 = arith.constant 0 : index
    %c0_3 = arith.constant 0 : index
    %4 = vector.load %arg3[%c0_2, %c0_3] : memref<128x128xbf16, #tpu.memory_space<vmem>>, vector<128x128xbf16>
    %cst = arith.constant dense<0.000000e+00> : vector<16x128xf32>
    %5 = tpu.matmul %3, %4, %cst {dimension_numbers = #tpu.dot_dimension_numbers<[1], [0], [0], [1], [0, 0, 1, 1], [], []>} : vector<16x128xbf16>, vector<128x128xbf16>, vector<16x128xf32> -> vector<16x128xf32>
    %c0_4 = arith.constant 0 : index
    %c0_5 = arith.constant 0 : index
    %6 = vector.load %arg4[%c0_4, %c0_5] : memref<128x128xbf16, #tpu.memory_space<vmem>>, vector<128x128xbf16>
    %cst_6 = arith.constant dense<0.000000e+00> : vector<16x128xf32>
    %7 = tpu.matmul %3, %6, %cst_6 {dimension_numbers = #tpu.dot_dimension_numbers<[1], [0], [0], [1], [0, 0, 1, 1], [], []>} : vector<16x128xbf16>, vector<128x128xbf16>, vector<16x128xf32> -> vector<16x128xf32>
    %c0_7 = arith.constant 0 : index
    %c0_8 = arith.constant 0 : index
    %8 = vector.load %arg5[%c0_7, %c0_8] : memref<1x128xf32, #tpu.memory_space<vmem>>, vector<1x128xf32>
    %9 = vector.broadcast %8 : vector<1x128xf32> to vector<16x128xf32>
    %10 = arith.addf %7, %9 : vector<16x128xf32>
    %cst_9 = arith.constant 0.000000e+00 : f32
    %11 = vector.broadcast %cst_9 : f32 to vector<16x128xf32>
    %12 = arith.subf %11, %5 : vector<16x128xf32>
    %13 = math.exp %12 : vector<16x128xf32>
    %cst_10 = arith.constant 1.000000e+00 : f32
    %14 = vector.broadcast %cst_10 : f32 to vector<16x128xf32>
    %15 = arith.addf %14, %13 : vector<16x128xf32>
    %16 = tpu.reciprocal %15 {approx = true} : vector<16x128xf32> -> vector<16x128xf32>
    %17 = arith.mulf %5, %16 : vector<16x128xf32>
    %18 = arith.mulf %17, %10 : vector<16x128xf32>
    %19 = arith.truncf %18 : vector<16x128xf32> to vector<16x128xbf16>
    %c0_11 = arith.constant 0 : index
    %c0_12 = arith.constant 0 : index
    %20 = vector.load %arg9[%c0_11, %c0_12] : memref<16x128xf32, #tpu.memory_space<vmem>>, vector<16x128xf32>
    %c0_13 = arith.constant 0 : index
    %c0_14 = arith.constant 0 : index
    %21 = vector.load %arg6[%c0_13, %c0_14] : memref<128x128xbf16, #tpu.memory_space<vmem>>, vector<128x128xbf16>
    %cst_15 = arith.constant dense<0.000000e+00> : vector<16x128xf32>
    %22 = tpu.matmul %19, %21, %cst_15 {dimension_numbers = #tpu.dot_dimension_numbers<[1], [0], [0], [1], [0, 0, 1, 1], [], []>} : vector<16x128xbf16>, vector<128x128xbf16>, vector<16x128xf32> -> vector<16x128xf32>
    %23 = arith.addf %20, %22 : vector<16x128xf32>
    %c0_16 = arith.constant 0 : index
    %c0_17 = arith.constant 0 : index
    %24 = vector.load %arg9[%c0_16, %c0_17] : memref<16x128xf32, #tpu.memory_space<vmem>>, vector<16x128xf32>
    tpu.vector_store %arg9[%c0_16, %c0_17], %23 {strides = array<i32>} : memref<16x128xf32, #tpu.memory_space<vmem>>, vector<16x128xf32>,
    %c2_i32 = arith.constant 2 : i32
    %25 = arith.cmpi eq, %arg1, %c2_i32 : i32
    %26 = arith.extui %25 : i1 to i32
    %c0_i32_18 = arith.constant 0 : i32
    %27 = arith.cmpi ne, %26, %c0_i32_18 : i32
    scf.if %27 {
      %c0_19 = arith.constant 0 : index
      %c0_20 = arith.constant 0 : index
      %28 = vector.load %arg9[%c0_19, %c0_20] : memref<16x128xf32, #tpu.memory_space<vmem>>, vector<16x128xf32>
      %c0_21 = arith.constant 0 : index
      %c0_22 = arith.constant 0 : index
      %29 = vector.load %arg7[%c0_21, %c0_22] : memref<1x128xf32, #tpu.memory_space<vmem>>, vector<1x128xf32>
      %30 = vector.broadcast %29 : vector<1x128xf32> to vector<16x128xf32>
      %31 = arith.addf %28, %30 : vector<16x128xf32>
      %32 = arith.truncf %31 : vector<16x128xf32> to vector<16x128xbf16>
      %c0_23 = arith.constant 0 : index
      %c0_24 = arith.constant 0 : index
      %33 = vector.load %arg8[%c0_23, %c0_24] : memref<16x128xbf16, #tpu.memory_space<vmem>>, vector<16x128xbf16>
      tpu.vector_store %arg8[%c0_23, %c0_24], %32 {strides = array<i32>} : memref<16x128xbf16, #tpu.memory_space<vmem>>, vector<16x128xbf16>,
    } else {
    }
    return
  }
  func.func @transform_0(%arg0: i32, %arg1: i32) -> (i32, i32) {
    %c0_i32 = arith.constant 0 : i32
    %c0_i32_0 = arith.constant 0 : i32
    return %arg0, %c0_i32 : i32, i32
  }
  func.func @transform_1(%arg0: i32, %arg1: i32) -> (i32, i32) {
    %c0_i32 = arith.constant 0 : i32
    %c0_i32_0 = arith.constant 0 : i32
    return %c0_i32, %arg1 : i32, i32
  }
  func.func @transform_2(%arg0: i32, %arg1: i32) -> (i32, i32) {
    %c0_i32 = arith.constant 0 : i32
    %c0_i32_0 = arith.constant 0 : i32
    return %c0_i32, %arg1 : i32, i32
  }
  func.func @transform_3(%arg0: i32, %arg1: i32) -> (i32, i32) {
    %c0_i32 = arith.constant 0 : i32
    %c0_i32_0 = arith.constant 0 : i32
    return %c0_i32, %arg1 : i32, i32
  }
  func.func @transform_4(%arg0: i32, %arg1: i32) -> (i32, i32) {
    %c0_i32 = arith.constant 0 : i32
    %c0_i32_0 = arith.constant 0 : i32
    return %arg1, %c0_i32 : i32, i32
  }
  func.func @transform_5(%arg0: i32, %arg1: i32) -> (i32, i32) {
    %c0_i32 = arith.constant 0 : i32
    %c0_i32_0 = arith.constant 0 : i32
    %c0_i32_1 = arith.constant 0 : i32
    return %c0_i32, %c0_i32_0 : i32, i32
  }
  func.func @transform_6(%arg0: i32, %arg1: i32) -> (i32, i32) {
    %c0_i32 = arith.constant 0 : i32
    %c0_i32_0 = arith.constant 0 : i32
    return %arg0, %c0_i32 : i32, i32
  }
}

</mosaic_0001>

<llo_original>
// kernel: tpu_custom_call.1
$region0: #{tpu_custom_call.1}
  #allocation0 [shape = 'u32[]', space=smem, size = 0x4, offset = 0x4, fixed_abs, tag = 'smem constant byte address 0x4 - core index']
  #allocation1 [shape = 'u32[144,128]{1,0:T(1,128)}', space=vmem, size = 0x12000, scoped, tag = 'internal scratch']
  #allocation2 [shape = 'f32[16,128]{1,0:T(8,128)}', space=vmem, size = 0x2000, scoped, tag = 'scratch operand']
  %s0 = inlined_call_operand.hbm [shape: bf16[16,128], index: 0, kind: input, shape index: {}]
  %s1 = inlined_call_operand.hbm [shape: bf16[128,384], index: 1, kind: input, shape index: {}]
  %s2 = inlined_call_operand.hbm [shape: bf16[128,384], index: 2, kind: input, shape index: {}]
  %s3 = inlined_call_operand.hbm [shape: f32[1,384], index: 3, kind: input, shape index: {}]
  %s4 = inlined_call_operand.hbm [shape: bf16[384,128], index: 4, kind: input, shape index: {}]
  %s5 = inlined_call_operand.hbm [shape: f32[1,128], index: 5, kind: input, shape index: {}]
  %s6 = inlined_call_operand.hbm [shape: bf16[16,128], index: 6, kind: output, shape index: {}]
  %s7 = sld [smem:[#allocation0]]
  $region89: #{tpu_custom_call.1} parent=0
    _
  %s9 = ssub.s32 1, %s7
  %s10 = scalar_select 0, %s9, %s7
  $region1: #{tpu_custom_call.1} parent=0
    #allocation3 [shape = 'u8[4096]{0}', space=vmem, size = 0x1000, scoped, tag = 'input window, operand 0, single buffered']
    #allocation4 [shape = 's32[2]{0}', space=sflag, size = 0x8, scoped, tag = 'scoped memory for tpu_custom_call.1']
    #allocation5 [shape = 's32[2]{0}', space=sflag, size = 0x8, scoped, tag = 'scoped memory for tpu_custom_call.1']
    #allocation6 [shape = 'u8[65536]{0}', space=vmem, size = 0x10000, scoped, tag = 'input window, operand 1']
    #allocation7 [shape = 's32[2]{0}', space=sflag, size = 0x8, scoped, tag = 'scoped memory for tpu_custom_call.1']
    #allocation8 [shape = 'u8[65536]{0}', space=vmem, size = 0x10000, scoped, tag = 'input window, operand 2']
    #allocation9 [shape = 'u8[1024]{0}', space=vmem, size = 0x400, scoped, tag = 'input window, operand 3']
    #allocation10 [shape = 's32[2]{0}', space=sflag, size = 0x8, scoped, tag = 'scoped memory for tpu_custom_call.1']
    #allocation11 [shape = 'u8[65536]{0}', space=vmem, size = 0x10000, scoped, tag = 'input window, operand 4']
    #allocation12 [shape = 'u8[512]{0}', space=vmem, size = 0x400, scoped, tag = 'input window, operand 5, single buffered']
    #allocation13 [shape = 's32[1]{0}', space=sflag, size = 0x4, scoped, tag = 'scoped memory for tpu_custom_call.1']
    #allocation14 [shape = 'u8[4096]{0}', space=vmem, size = 0x1000, scoped, tag = 'output window, operand 0, single buffered']
    %11 = vsyncpa [#allocation4], 0
    %12 = vsyncpa [#allocation7], 0
    %s13 = scalar_lea.sflag [#allocation7], 1
    %14 = vsyncpa %s13, 0
    %15 = vsyncpa [#allocation10], 0
    %s16 = scalar_lea.sflag [#allocation10], 1
    %17 = vsyncpa %s16, 0
    %18 = vsyncpa [#allocation13], 0
    %19 = vsyncpa [#allocation5], 0
    loop: start=0, step=1, limit=5
    $region2: #{tpu_custom_call.1} parent=1 // loop_pre_header
      _
    $region3: #{tpu_custom_call.1} parent=1 // loop_header
      %s21 = sphi 0, %s25
      %p22 = scmp.ge.s32.totalorder %s21, 5
      %s28 = sphi 0, %s40
      %s29 = sphi 0, %s36
      %s30 = sphi 0, %s28
      %s31 = sphi 0, %s29
      %s32 = sphi 0, %s30
      %s33 = sphi 0, %s31
      %s43 = sphi 0, %s45
      %s46 = sphi 0, %s43
      %s47 = sphi 0, %s46
      %s63 = sphi 0, %s47
      %s69 = sphi 0, %s71
      %s72 = sphi 0, %s69
      %s73 = sphi 0, %s72
      %s89 = sphi 0, %s73
      %s95 = sphi 0, %s97
      %s98 = sphi 0, %s95
      %s99 = sphi 0, %s98
      %s115 = sphi 0, %s99
      %s121 = sphi 0, %s123
      %s124 = sphi 0, %s121
      %s125 = sphi 0, %s124
      %s141 = sphi 0, %s125
      %s147 = sphi 0, %s149
      %s150 = sphi 0, %s147
      %s151 = sphi 0, %s150
      %s167 = sphi 0, %s151
      %s171 = sphi 0, %s171
      %s173 = sphi 0, %s171
      %s174 = sphi 0, %s173
      %s188 = sphi 0, %s174
      %s194 = sphi 0, %s196
      %s197 = sphi 0, %s194
      %s198 = sphi 0, %s197
      %s214 = sphi 0, %s198
    $region4: #{tpu_custom_call.1} parent=1 // loop_header_branch
      %24 = sbr.rel (%p22) target = $region8
    $region5: #{tpu_custom_call.1} parent=1 // loop_body
      %s26 = ssub.s32 %s21, 1
      %s27 = ssub.s32 %s21, 2
      %s34 = sadd.s32 1, %s29
      %p35 = scmp.ge.s32.totalorder %s34, 3
      %s36 = scalar_select %p35, 0, %s34
      %s37 = sadd.s32 1, %s28
      %s38 = scalar_select %p35, %s37, %s28
      %p39 = scmp.ge.s32.totalorder %s38, 1
      %s40 = scalar_select %p39, 0, %s38
      %s41 = ssub.s32 %s28, %s40
      %p42 = scmp.eq.s32.totalorder %s41, 0
      %s44 = sadd.s32 %s43, 1
      %s45 = scalar_select %p42, %s43, %s44
      %p48 = pneg %p42
      %p49 = scmp.eq.s32.totalorder %s21, 2
      %p50 = por %p48, %p49
      %p51 = scmp.ne.s32.totalorder %s43, %s46
      %p52 = scmp.eq.s32.totalorder %s21, 0
      %p53 = por %p51, %p52
      %p54 = scmp.ne.s32.totalorder %s43, %s46
      %p55 = scmp.eq.s32.totalorder %s26, 2
      %p56 = por %p54, %p55
      %p57 = scmp.ne.s32.totalorder %s46, %s47
      %p58 = scmp.eq.s32.totalorder %s26, 0
      %p59 = por %p57, %p58
      %p60 = scmp.ne.s32.totalorder %s46, %s47
      %p61 = scmp.eq.s32.totalorder %s27, 2
      %p62 = por %p60, %p61
      %p64 = scmp.ne.s32.totalorder %s47, %s63
      %p65 = scmp.eq.s32.totalorder %s27, 0
      %p66 = por %p64, %p65
      %s67 = ssub.s32 %s29, %s36
      %p68 = scmp.eq.s32.totalorder %s67, 0
      %s70 = sadd.s32 %s69, 1
      %s71 = scalar_select %p68, %s69, %s70
      %p74 = pneg %p68
      %p75 = scmp.eq.s32.totalorder %s21, 2
      %p76 = por %p74, %p75
      %p77 = scmp.ne.s32.totalorder %s69, %s72
      %p78 = scmp.eq.s32.totalorder %s21, 0
      %p79 = por %p77, %p78
      %p80 = scmp.ne.s32.totalorder %s69, %s72
      %p81 = scmp.eq.s32.totalorder %s26, 2
      %p82 = por %p80, %p81
      %p83 = scmp.ne.s32.totalorder %s72, %s73
      %p84 = scmp.eq.s32.totalorder %s26, 0
      %p85 = por %p83, %p84
      %p86 = scmp.ne.s32.totalorder %s72, %s73
      %p87 = scmp.eq.s32.totalorder %s27, 2
      %p88 = por %p86, %p87
      %p90 = scmp.ne.s32.totalorder %s73, %s89
      %p91 = scmp.eq.s32.totalorder %s27, 0
      %p92 = por %p90, %p91
      %s93 = ssub.s32 %s29, %s36
      %p94 = scmp.eq.s32.totalorder %s93, 0
      %s96 = sadd.s32 %s95, 1
      %s97 = scalar_select %p94, %s95, %s96
      %p100 = pneg %p94
      %p101 = scmp.eq.s32.totalorder %s21, 2
      %p102 = por %p100, %p101
      %p103 = scmp.ne.s32.totalorder %s95, %s98
      %p104 = scmp.eq.s32.totalorder %s21, 0
      %p105 = por %p103, %p104
      %p106 = scmp.ne.s32.totalorder %s95, %s98
      %p107 = scmp.eq.s32.totalorder %s26, 2
      %p108 = por %p106, %p107
      %p109 = scmp.ne.s32.totalorder %s98, %s99
      %p110 = scmp.eq.s32.totalorder %s26, 0
      %p111 = por %p109, %p110
      %p112 = scmp.ne.s32.totalorder %s98, %s99
      %p113 = scmp.eq.s32.totalorder %s27, 2
      %p114 = por %p112, %p113
      %p116 = scmp.ne.s32.totalorder %s99, %s115
      %p117 = scmp.eq.s32.totalorder %s27, 0
      %p118 = por %p116, %p117
      %s119 = ssub.s32 %s29, %s36
      %p120 = scmp.eq.s32.totalorder %s119, 0
      %s122 = sadd.s32 %s121, 1
      %s123 = scalar_select %p120, %s121, %s122
      %p126 = pneg %p120
      %p127 = scmp.eq.s32.totalorder %s21, 2
      %p128 = por %p126, %p127
      %p129 = scmp.ne.s32.totalorder %s121, %s124
      %p130 = scmp.eq.s32.totalorder %s21, 0
      %p131 = por %p129, %p130
      %p132 = scmp.ne.s32.totalorder %s121, %s124
      %p133 = scmp.eq.s32.totalorder %s26, 2
      %p134 = por %p132, %p133
      %p135 = scmp.ne.s32.totalorder %s124, %s125
      %p136 = scmp.eq.s32.totalorder %s26, 0
      %p137 = por %p135, %p136
      %p138 = scmp.ne.s32.totalorder %s124, %s125
      %p139 = scmp.eq.s32.totalorder %s27, 2
      %p140 = por %p138, %p139
      %p142 = scmp.ne.s32.totalorder %s125, %s141
      %p143 = scmp.eq.s32.totalorder %s27, 0
      %p144 = por %p142, %p143
      %s145 = ssub.s32 %s29, %s36
      %p146 = scmp.eq.s32.totalorder %s145, 0
      %s148 = sadd.s32 %s147, 1
      %s149 = scalar_select %p146, %s147, %s148
      %p152 = pneg %p146
      %p153 = scmp.eq.s32.totalorder %s21, 2
      %p154 = por %p152, %p153
      %p155 = scmp.ne.s32.totalorder %s147, %s150
      %p156 = scmp.eq.s32.totalorder %s21, 0
      %p157 = por %p155, %p156
      %p158 = scmp.ne.s32.totalorder %s147, %s150
      %p159 = scmp.eq.s32.totalorder %s26, 2
      %p160 = por %p158, %p159
      %p161 = scmp.ne.s32.totalorder %s150, %s151
      %p162 = scmp.eq.s32.totalorder %s26, 0
      %p163 = por %p161, %p162
      %p164 = scmp.ne.s32.totalorder %s150, %s151
      %p165 = scmp.eq.s32.totalorder %s27, 2
      %p166 = por %p164, %p165
      %p168 = scmp.ne.s32.totalorder %s151, %s167
      %p169 = scmp.eq.s32.totalorder %s27, 0
      %p170 = por %p168, %p169
      %s172 = sadd.s32 %s171, 1
      %p175 = scmp.eq.s32.totalorder %s21, 2
      %p176 = scmp.ne.s32.totalorder %s171, %s173
      %p177 = scmp.eq.s32.totalorder %s21, 0
      %p178 = por %p176, %p177
      %p179 = scmp.ne.s32.totalorder %s171, %s173
      %p180 = scmp.eq.s32.totalorder %s26, 2
      %p181 = por %p179, %p180
      %p182 = scmp.ne.s32.totalorder %s173, %s174
      %p183 = scmp.eq.s32.totalorder %s26, 0
      %p184 = por %p182, %p183
      %p185 = scmp.ne.s32.totalorder %s173, %s174
      %p186 = scmp.eq.s32.totalorder %s27, 2
      %p187 = por %p185, %p186
      %p189 = scmp.ne.s32.totalorder %s174, %s188
      %p190 = scmp.eq.s32.totalorder %s27, 0
      %p191 = por %p189, %p190
      %s192 = ssub.s32 %s28, %s40
      %p193 = scmp.eq.s32.totalorder %s192, 0
      %s195 = sadd.s32 %s194, 1
      %s196 = scalar_select %p193, %s194, %s195
      %p199 = pneg %p193
      %p200 = scmp.eq.s32.totalorder %s21, 2
      %p201 = por %p199, %p200
      %p202 = scmp.ne.s32.totalorder %s194, %s197
      %p203 = scmp.eq.s32.totalorder %s21, 0
      %p204 = por %p202, %p203
      %p205 = scmp.ne.s32.totalorder %s194, %s197
      %p206 = scmp.eq.s32.totalorder %s26, 2
      %p207 = por %p205, %p206
      %p208 = scmp.ne.s32.totalorder %s197, %s198
      %p209 = scmp.eq.s32.totalorder %s26, 0
      %p210 = por %p208, %p209
      %p211 = scmp.ne.s32.totalorder %s197, %s198
      %p212 = scmp.eq.s32.totalorder %s27, 2
      %p213 = por %p211, %p212
      %p215 = scmp.ne.s32.totalorder %s198, %s214
      %p216 = scmp.eq.s32.totalorder %s27, 0
      %p217 = por %p215, %p216
      %p218 = scmp.le.s32.totalorder 1, %s21
      %p219 = scmp.lt.s32.totalorder %s21, 4
      %p220 = pnand %p218, %p219
      %p221 = pneg %p220
      // Predicated region
      $region9: #{tpu_custom_call.1} parent=5 // pred_check
        _
      $region10: #{tpu_custom_call.1} parent=5 // pred_check_branch
        %223 = sbr.rel (%p220) target = $region12
      $region11: #{tpu_custom_call.1} parent=5 // pred_region
        %s224 = ssub.s32 %s21, 1
        // Predicated region
        $region13: #{tpu_custom_call.1} parent=11 // pred_check
          %p225 = pneg %p59
        $region14: #{tpu_custom_call.1} parent=11 // pred_check_branch
          %227 = sbr.rel (%p225) target = $region16
        $region15: #{tpu_custom_call.1} parent=11 // pred_region
          %s228 = smul.u32 2, %s30
          %s230 = ssub.s32 128, 128
          %231 = vsyncadd [#allocation4], %s230
          %s232 = smul.addr %s228, 64
          %s233 = scalar_lea.hbm %s0, %s232
          %s234 = sshll.u32 [#allocation3], 4
          %s235 = int_to_ptr.vmem [resolvable:$true] %s234
          %240 = dma.hbm_to_vmem [thread:$0]  %s233, 128, %s235, [#allocation4], 64, 64, 4
        $region16: #{tpu_custom_call.1} parent=11 // pred_fallthru
          _
        // Predicated region
        $region17: #{tpu_custom_call.1} parent=11 // pred_check
          %p241 = pneg %p184
        $region18: #{tpu_custom_call.1} parent=11 // pred_check_branch
          %243 = sbr.rel (%p241) target = $region20
        $region19: #{tpu_custom_call.1} parent=11 // pred_region
          %s245 = ssub.s32 16, 16
          %246 = vsyncadd [#allocation13], %s245
          %s248 = sshll.u32 [#allocation12], 4
          %s249 = int_to_ptr.vmem [resolvable:$true] %s248
          %251 = dma.hbm_to_vmem [thread:$0]  %s5, 16, %s249, [#allocation13]
        $region20: #{tpu_custom_call.1} parent=11 // pred_fallthru
          _
      $region12: #{tpu_custom_call.1} parent=5 // pred_fallthru
        _
      %p252 = scmp.lt.s32.totalorder %s21, 3
      // Predicated region
      $region21: #{tpu_custom_call.1} parent=5 // pred_check
        %p253 = pneg %p252
      $region22: #{tpu_custom_call.1} parent=5 // pred_check_branch
        %255 = sbr.rel (%p253) target = $region24
      $region23: #{tpu_custom_call.1} parent=5 // pred_region
        // Predicated region
        $region25: #{tpu_custom_call.1} parent=23 // pred_check
          %p256 = pneg %p79
        $region26: #{tpu_custom_call.1} parent=23 // pred_check_branch
          %258 = sbr.rel (%p256) target = $region28
        $region27: #{tpu_custom_call.1} parent=23 // pred_region
          %s259 = sand.u32 %s21, 1
          %s260 = scalar_lea.sflag [#allocation7], %s259
          %s261 = sand.u32 %s69, 1
          %s262 = smul.addr %s261, 64
          %s263 = scalar_lea.vmem [#allocation6], %s262
          %s265 = ssub.s32 1024, 1024
          %266 = vsyncadd %s260, %s265
          %s267 = smul.addr %s29, 64
          %s268 = scalar_lea.hbm %s1, %s267
          %s269 = sshll.u32 %s263, 4
          %s270 = int_to_ptr.vmem [resolvable:$true] %s269
          %275 = dma.hbm_to_vmem [thread:$0]  %s268, 1024, %s270, %s260, 192, 64, 4
        $region28: #{tpu_custom_call.1} parent=23 // pred_fallthru
          _
        // Predicated region
        $region29: #{tpu_custom_call.1} parent=23 // pred_check
          %p276 = pneg %p105
        $region30: #{tpu_custom_call.1} parent=23 // pred_check_branch
          %278 = sbr.rel (%p276) target = $region32
        $region31: #{tpu_custom_call.1} parent=23 // pred_region
          %s279 = sand.u32 %s21, 1
          %s280 = scalar_lea.sflag [#allocation7], %s279
          %s281 = sand.u32 %s95, 1
          %s282 = smul.addr %s281, 64
          %s283 = scalar_lea.vmem [#allocation8], %s282
          %s285 = ssub.s32 1024, 1024
          %286 = vsyncadd %s280, %s285
          %s287 = smul.addr %s29, 64
          %s288 = scalar_lea.hbm %s2, %s287
          %s289 = sshll.u32 %s283, 4
          %s290 = int_to_ptr.vmem [resolvable:$true] %s289
          %295 = dma.hbm_to_vmem [thread:$0]  %s288, 1024, %s290, %s280, 192, 64, 4
        $region32: #{tpu_custom_call.1} parent=23 // pred_fallthru
          _
        // Predicated region
        $region33: #{tpu_custom_call.1} parent=23 // pred_check
          %p296 = pneg %p131
        $region34: #{tpu_custom_call.1} parent=23 // pred_check_branch
          %298 = sbr.rel (%p296) target = $region36
        $region35: #{tpu_custom_call.1} parent=23 // pred_region
          %s299 = sand.u32 %s21, 1
          %s300 = scalar_lea.sflag [#allocation10], %s299
          %s301 = sand.u32 %s121, 1
          %s302 = scalar_lea.vmem [#allocation9], %s301
          %s304 = ssub.s32 16, 16
          %305 = vsyncadd %s300, %s304
          %s306 = smul.addr %s29, 16
          %s307 = scalar_lea.hbm %s3, %s306
          %s309 = sshll.u32 %s302, 4
          %s310 = int_to_ptr.vmem [resolvable:$true] %s309
          %312 = dma.hbm_to_vmem [thread:$0]  %s307, 16, %s310, %s300
        $region36: #{tpu_custom_call.1} parent=23 // pred_fallthru
          _
        // Predicated region
        $region37: #{tpu_custom_call.1} parent=23 // pred_check
          %p313 = pneg %p157
        $region38: #{tpu_custom_call.1} parent=23 // pred_check_branch
          %315 = sbr.rel (%p313) target = $region40
        $region39: #{tpu_custom_call.1} parent=23 // pred_region
          %s316 = sand.u32 %s21, 1
          %s317 = scalar_lea.sflag [#allocation10], %s316
          %s318 = sand.u32 %s147, 1
          %s319 = smul.addr %s318, 64
          %s320 = scalar_lea.vmem [#allocation11], %s319
          %s321 = smul.u32 16, %s29
          %s323 = ssub.s32 1024, 1024
          %324 = vsyncadd %s317, %s323
          %s325 = smul.addr %s321, 64
          %s326 = scalar_lea.hbm %s4, %s325
          %s327 = sshll.u32 %s320, 4
          %s328 = int_to_ptr.vmem [resolvable:$true] %s327
          %333 = dma.hbm_to_vmem [thread:$0]  %s326, 1024, %s328, %s317, 64, 64, 4
        $region40: #{tpu_custom_call.1} parent=23 // pred_fallthru
          _
      $region24: #{tpu_custom_call.1} parent=5 // pred_fallthru
        _
      %p334 = scmp.le.s32.totalorder 1, %s21
      %p335 = scmp.lt.s32.totalorder %s21, 4
      %p336 = pnand %p334, %p335
      %p337 = pneg %p336
      // Predicated region
      $region41: #{tpu_custom_call.1} parent=5 // pred_check
        _
      $region42: #{tpu_custom_call.1} parent=5 // pred_check_branch
        %339 = sbr.rel (%p336) target = $region44
      $region43: #{tpu_custom_call.1} parent=5 // pred_region
        %s340 = ssub.s32 %s21, 1
        // Predicated region
        $region45: #{tpu_custom_call.1} parent=43 // pred_check
          %p341 = pneg %p59
        $region46: #{tpu_custom_call.1} parent=43 // pred_check_branch
          %343 = sbr.rel (%p341) target = $region48
        $region47: #{tpu_custom_call.1} parent=43 // pred_region
          %344 = dma.done [#allocation4], 128
        $region48: #{tpu_custom_call.1} parent=43 // pred_fallthru
          _
        %s345 = sand.u32 %s26, 1
        %s346 = scalar_lea.sflag [#allocation7], %s345
        %s347 = sand.u32 %s72, 1
        %s348 = smul.addr %s347, 64
        %s349 = scalar_lea.vmem [#allocation6], %s348
        // Predicated region
        $region49: #{tpu_custom_call.1} parent=43 // pred_check
          %p350 = pneg %p85
        $region50: #{tpu_custom_call.1} parent=43 // pred_check_branch
          %352 = sbr.rel (%p350) target = $region52
        $region51: #{tpu_custom_call.1} parent=43 // pred_region
          %353 = dma.done %s346, 1024
        $region52: #{tpu_custom_call.1} parent=43 // pred_fallthru
          _
        %s354 = sand.u32 %s26, 1
        %s355 = scalar_lea.sflag [#allocation7], %s354
        %s356 = sand.u32 %s98, 1
        %s357 = smul.addr %s356, 64
        %s358 = scalar_lea.vmem [#allocation8], %s357
        // Predicated region
        $region53: #{tpu_custom_call.1} parent=43 // pred_check
          %p359 = pneg %p111
        $region54: #{tpu_custom_call.1} parent=43 // pred_check_branch
          %361 = sbr.rel (%p359) target = $region56
        $region55: #{tpu_custom_call.1} parent=43 // pred_region
          %362 = dma.done %s355, 1024
        $region56: #{tpu_custom_call.1} parent=43 // pred_fallthru
          _
        %s363 = sand.u32 %s26, 1
        %s364 = scalar_lea.sflag [#allocation10], %s363
        %s365 = sand.u32 %s124, 1
        %s366 = scalar_lea.vmem [#allocation9], %s365
        // Predicated region
        $region57: #{tpu_custom_call.1} parent=43 // pred_check
          %p367 = pneg %p137
        $region58: #{tpu_custom_call.1} parent=43 // pred_check_branch
          %369 = sbr.rel (%p367) target = $region60
        $region59: #{tpu_custom_call.1} parent=43 // pred_region
          %370 = dma.done %s364, 16
        $region60: #{tpu_custom_call.1} parent=43 // pred_fallthru
          _
        %s371 = sand.u32 %s26, 1
        %s372 = scalar_lea.sflag [#allocation10], %s371
        %s373 = sand.u32 %s150, 1
        %s374 = smul.addr %s373, 64
        %s375 = scalar_lea.vmem [#allocation11], %s374
        // Predicated region
        $region61: #{tpu_custom_call.1} parent=43 // pred_check
          %p376 = pneg %p163
        $region62: #{tpu_custom_call.1} parent=43 // pred_check_branch
          %378 = sbr.rel (%p376) target = $region64
        $region63: #{tpu_custom_call.1} parent=43 // pred_region
          %379 = dma.done %s372, 1024
        $region64: #{tpu_custom_call.1} parent=43 // pred_fallthru
          _
        // Predicated region
        $region65: #{tpu_custom_call.1} parent=43 // pred_check
          %p380 = pneg %p184
        $region66: #{tpu_custom_call.1} parent=43 // pred_check_branch
          %382 = sbr.rel (%p380) target = $region68
        $region67: #{tpu_custom_call.1} parent=43 // pred_region
          %383 = dma.done [#allocation13], 16
        $region68: #{tpu_custom_call.1} parent=43 // pred_fallthru
          _
        %p384 = pneg %p59
        %p385 = pneg %p56
        %s386 = sand.u32 %s26, 1
        %s387 = scalar_lea.sflag [#allocation7], %s386
        %s388 = sand.u32 %s72, 1
        %s389 = smul.addr %s388, 64
        %s390 = scalar_lea.vmem [#allocation6], %s389
        %p391 = pneg %p85
        %p392 = pneg %p82
        %s393 = sand.u32 %s26, 1
        %s394 = scalar_lea.sflag [#allocation7], %s393
        %s395 = sand.u32 %s98, 1
        %s396 = smul.addr %s395, 64
        %s397 = scalar_lea.vmem [#allocation8], %s396
        %p398 = pneg %p111
        %p399 = pneg %p108
        %s400 = sand.u32 %s26, 1
        %s401 = scalar_lea.sflag [#allocation10], %s400
        %s402 = sand.u32 %s124, 1
        %s403 = scalar_lea.vmem [#allocation9], %s402
        %p404 = pneg %p137
        %p405 = pneg %p134
        %s406 = sand.u32 %s26, 1
        %s407 = scalar_lea.sflag [#allocation10], %s406
        %s408 = sand.u32 %s150, 1
        %s409 = smul.addr %s408, 64
        %s410 = scalar_lea.vmem [#allocation11], %s409
        %p411 = pneg %p163
        %p412 = pneg %p160
        %p413 = pneg %p184
        %p414 = pneg %p181
        %p415 = pneg %p210
        %p416 = pneg %p207
        %s417 = smul.u32 2, %s30
        %s418 = smul.u32 16, %s31
        %s419 = smul.u32 2, %s30
        %p421 = scmp.eq.s32.totalorder %s31, 0
        // Predicated region
        $region69: #{tpu_custom_call.1} parent=43 // pred_check
          %p422 = pneg %p421
        $region70: #{tpu_custom_call.1} parent=43 // pred_check_branch
          %424 = sbr.rel (%p422) target = $region72
        $region71: #{tpu_custom_call.1} parent=43 // pred_region
          %425 = vst [vmem:[#allocation2] sm:$0xff] 0.0
          %426 = vst [vmem:[#allocation2 + $0x8] sm:$0xff] 0.0
        $region72: #{tpu_custom_call.1} parent=43 // pred_fallthru
          _
        %v427 = vld [vmem:[#allocation3] sm:$0xf]
        %v428 = vld [vmem:[#allocation3 + $0x4] sm:$0xf]
        %v429 = vld [vmem:[%s349] sm:$0xf]
        %v430 = vld [vmem:[%s349 + $0x4] sm:$0xf]
        %v431 = vld [vmem:[%s349 + $0x8] sm:$0xf]
        %v432 = vld [vmem:[%s349 + $0xc] sm:$0xf]
        %v433 = vld [vmem:[%s349 + $0x10] sm:$0xf]
        %v434 = vld [vmem:[%s349 + $0x14] sm:$0xf]
        %v435 = vld [vmem:[%s349 + $0x18] sm:$0xf]
        %v436 = vld [vmem:[%s349 + $0x1c] sm:$0xf]
        %v437 = vld [vmem:[%s349 + $0x20] sm:$0xf]
        %v438 = vld [vmem:[%s349 + $0x24] sm:$0xf]
        %v439 = vld [vmem:[%s349 + $0x28] sm:$0xf]
        %v440 = vld [vmem:[%s349 + $0x2c] sm:$0xf]
        %v441 = vld [vmem:[%s349 + $0x30] sm:$0xf]
        %v442 = vld [vmem:[%s349 + $0x34] sm:$0xf]
        %v443 = vld [vmem:[%s349 + $0x38] sm:$0xf]
        %v444 = vld [vmem:[%s349 + $0x3c] sm:$0xf]
        %v447 = vunpack.c.l.b16 %v427
        %v448 = vunpack.c.l.b16 %v428
        %v449 = vpack.c.b16 %v448, %v447
        %v467 = vunpack.c.l.b16 %v429
        %v468 = vunpack.c.l.b16 %v430
        %v469 = vunpack.c.l.b16 %v431
        %v470 = vunpack.c.l.b16 %v432
        %v471 = vunpack.c.l.b16 %v433
        %v472 = vunpack.c.l.b16 %v434
        %v473 = vunpack.c.l.b16 %v435
        %v474 = vunpack.c.l.b16 %v436
        %v475 = vunpack.c.l.b16 %v437
        %v476 = vunpack.c.l.b16 %v438
        %v477 = vunpack.c.l.b16 %v439
        %v478 = vunpack.c.l.b16 %v440
        %v479 = vunpack.c.l.b16 %v441
        %v480 = vunpack.c.l.b16 %v442
        %v481 = vunpack.c.l.b16 %v443
        %v482 = vunpack.c.l.b16 %v444
        %v483 = vpack.c.b16 %v468, %v467
        %v484 = vpack.c.b16 %v470, %v469
        %v485 = vpack.c.b16 %v472, %v471
        %v486 = vpack.c.b16 %v474, %v473
        %v487 = vpack.c.b16 %v476, %v475
        %v488 = vpack.c.b16 %v478, %v477
        %v489 = vpack.c.b16 %v480, %v479
        %v490 = vpack.c.b16 %v482, %v481
        %499 = vmatprep.subr.bf16.mxu0 0
        %500 = vmatpush1.bf16.msra.mxu0 %v483
        %501 = vmatprep.subr.bf16.mxu0 0
        %502 = vmatpush1.bf16.msra.mxu0 %v484
        %503 = vmatprep.subr.bf16.mxu0 0
        %504 = vmatpush1.bf16.msra.mxu0 %v485
        %505 = vmatprep.subr.bf16.mxu0 0
        %506 = vmatpush1.bf16.msra.mxu0 %v486
        %507 = vmatprep.subr.bf16.mxu0 0
        %508 = vmatpush1.bf16.msra.mxu0 %v487
        %509 = vmatprep.subr.bf16.mxu0 0
        %510 = vmatpush1.bf16.msra.mxu0 %v488
        %511 = vmatprep.subr.bf16.mxu0 0
        %512 = vmatpush1.bf16.msra.mxu0 %v489
        %513 = vmatprep.subr.bf16.mxu0 0
        %514 = vmatpush1.bf16.msra.mxu0 %v490
        %515 = vmatprep.subr.bf16.mxu0 0
        %516 = vmatpush1.bf16.msra.mxu0 0
        %517 = vmatprep.subr.bf16.mxu0 0
        %518 = vmatpush1.bf16.msra.mxu0 0
        %519 = vmatprep.subr.bf16.mxu0 0
        %520 = vmatpush1.bf16.msra.mxu0 0
        %521 = vmatprep.subr.bf16.mxu0 0
        %522 = vmatpush1.bf16.msra.mxu0 0
        %523 = vmatprep.subr.bf16.mxu0 0
        %524 = vmatpush1.bf16.msra.mxu0 0
        %525 = vmatprep.subr.bf16.mxu0 0
        %526 = vmatpush1.bf16.msra.mxu0 0
        %527 = vmatprep.subr.bf16.mxu0 0
        %528 = vmatpush1.bf16.msra.mxu0 0
        %529 = vmatprep.subr.bf16.mxu0 0
        %530 = vmatpush1.bf16.msra.mxu0 0
        %531 = vmatprep.mubr.bf16.mxu0 0
        %532 = vmatmul.mubr.bf16.gmra.mrb[0].mxu0 %v449
        %v533 = vpop.f32.mrb[0].mxu0
        %v534 = vadd.f32 0.0, %v533
        %v535 = vpop.f32.mrb[0].mxu0
        %v536 = vpop.f32.mrb[0].mxu0
        %v537 = vadd.f32 0.0, %v536
        %v538 = vpop.f32.mrb[0].mxu0
        %539 = vdwg.mxu0
        %v540 = vld [vmem:[%s358] sm:$0xf]
        %v541 = vld [vmem:[%s358 + $0x4] sm:$0xf]
        %v542 = vld [vmem:[%s358 + $0x8] sm:$0xf]
        %v543 = vld [vmem:[%s358 + $0xc] sm:$0xf]
        %v544 = vld [vmem:[%s358 + $0x10] sm:$0xf]
        %v545 = vld [vmem:[%s358 + $0x14] sm:$0xf]
        %v546 = vld [vmem:[%s358 + $0x18] sm:$0xf]
        %v547 = vld [vmem:[%s358 + $0x1c] sm:$0xf]
        %v548 = vld [vmem:[%s358 + $0x20] sm:$0xf]
        %v549 = vld [vmem:[%s358 + $0x24] sm:$0xf]
        %v550 = vld [vmem:[%s358 + $0x28] sm:$0xf]
        %v551 = vld [vmem:[%s358 + $0x2c] sm:$0xf]
        %v552 = vld [vmem:[%s358 + $0x30] sm:$0xf]
        %v553 = vld [vmem:[%s358 + $0x34] sm:$0xf]
        %v554 = vld [vmem:[%s358 + $0x38] sm:$0xf]
        %v555 = vld [vmem:[%s358 + $0x3c] sm:$0xf]
        %v556 = vld [vmem:[%s366] sm:$0x1]
        %v558 = vlaneseq
        %v559 = vshrl.u32 %v558, 7
        %v560 = vsub.s32 0, %v559
        %v561 = vrot.slane %v556, %v560
        %v579 = vunpack.c.l.b16 %v540
        %v580 = vunpack.c.l.b16 %v541
        %v581 = vunpack.c.l.b16 %v542
        %v582 = vunpack.c.l.b16 %v543
        %v583 = vunpack.c.l.b16 %v544
        %v584 = vunpack.c.l.b16 %v545
        %v585 = vunpack.c.l.b16 %v546
        %v586 = vunpack.c.l.b16 %v547
        %v587 = vunpack.c.l.b16 %v548
        %v588 = vunpack.c.l.b16 %v549
        %v589 = vunpack.c.l.b16 %v550
        %v590 = vunpack.c.l.b16 %v551
        %v591 = vunpack.c.l.b16 %v552
        %v592 = vunpack.c.l.b16 %v553
        %v593 = vunpack.c.l.b16 %v554
        %v594 = vunpack.c.l.b16 %v555
        %v595 = vpack.c.b16 %v580, %v579
        %v596 = vpack.c.b16 %v582, %v581
        %v597 = vpack.c.b16 %v584, %v583
        %v598 = vpack.c.b16 %v586, %v585
        %v599 = vpack.c.b16 %v588, %v587
        %v600 = vpack.c.b16 %v590, %v589
        %v601 = vpack.c.b16 %v592, %v591
        %v602 = vpack.c.b16 %v594, %v593
        %611 = vmatprep.subr.bf16.mxu0 0
        %612 = vmatpush1.bf16.msra.mxu0 %v595
        %613 = vmatprep.subr.bf16.mxu0 0
        %614 = vmatpush1.bf16.msra.mxu0 %v596
        %615 = vmatprep.subr.bf16.mxu0 0
        %616 = vmatpush1.bf16.msra.mxu0 %v597
        %617 = vmatprep.subr.bf16.mxu0 0
        %618 = vmatpush1.bf16.msra.mxu0 %v598
        %619 = vmatprep.subr.bf16.mxu0 0
        %620 = vmatpush1.bf16.msra.mxu0 %v599
        %621 = vmatprep.subr.bf16.mxu0 0
        %622 = vmatpush1.bf16.msra.mxu0 %v600
        %623 = vmatprep.subr.bf16.mxu0 0
        %624 = vmatpush1.bf16.msra.mxu0 %v601
        %625 = vmatprep.subr.bf16.mxu0 0
        %626 = vmatpush1.bf16.msra.mxu0 %v602
        %627 = vmatprep.subr.bf16.mxu0 0
        %628 = vmatpush1.bf16.msra.mxu0 0
        %629 = vmatprep.subr.bf16.mxu0 0
        %630 = vmatpush1.bf16.msra.mxu0 0
        %631 = vmatprep.subr.bf16.mxu0 0
        %632 = vmatpush1.bf16.msra.mxu0 0
        %633 = vmatprep.subr.bf16.mxu0 0
        %634 = vmatpush1.bf16.msra.mxu0 0
        %635 = vmatprep.subr.bf16.mxu0 0
        %636 = vmatpush1.bf16.msra.mxu0 0
        %637 = vmatprep.subr.bf16.mxu0 0
        %638 = vmatpush1.bf16.msra.mxu0 0
        %639 = vmatprep.subr.bf16.mxu0 0
        %640 = vmatpush1.bf16.msra.mxu0 0
        %641 = vmatprep.subr.bf16.mxu0 0
        %642 = vmatpush1.bf16.msra.mxu0 0
        %643 = vmatprep.mubr.bf16.mxu0 0
        %644 = vmatmul.mubr.bf16.gmra.mrb[0].mxu0 %v449
        %v645 = vpop.f32.mrb[0].mxu0
        %v646 = vadd.f32 %v561, %v645
        %v647 = vpop.f32.mrb[0].mxu0
        %v648 = vpop.f32.mrb[0].mxu0
        %v649 = vadd.f32 %v561, %v648
        %v650 = vpop.f32.mrb[0].mxu0
        %651 = vdwg.mxu0
        %v652 = vsub.f32 0.0, %v534
        %v653 = vsub.f32 0.0, %v537
        %v654 = vmul.f32 %v652, 1.442695
        %v655 = vpow.pop %v654
        %v656 = vmul.f32 %v653, 1.442695
        %v657 = vpow.pop %v656
        %v658 = vadd.f32 %v655, 1.0
        %v659 = vadd.f32 %v657, 1.0
        %v660 = vrcp.pop %v658
        %v661 = vrcp.pop %v659
        %v662 = vmul.f32 %v534, %v660
        %v663 = vmul.f32 %v537, %v661
        %v664 = vmul.f32 %v662, %v646
        %v665 = vmul.f32 %v663, %v649
        %v666 = vpack.c.bf16 %v665, %v664
        %v667 = vld [vmem:[#allocation2] sm:$0xff]
        %v668 = vld [vmem:[#allocation2 + $0x8] sm:$0xff]
        %v669 = vld [vmem:[%s375] sm:$0xf]
        %v670 = vld [vmem:[%s375 + $0x4] sm:$0xf]
        %v671 = vld [vmem:[%s375 + $0x8] sm:$0xf]
        %v672 = vld [vmem:[%s375 + $0xc] sm:$0xf]
        %v673 = vld [vmem:[%s375 + $0x10] sm:$0xf]
        %v674 = vld [vmem:[%s375 + $0x14] sm:$0xf]
        %v675 = vld [vmem:[%s375 + $0x18] sm:$0xf]
        %v676 = vld [vmem:[%s375 + $0x1c] sm:$0xf]
        %v677 = vld [vmem:[%s375 + $0x20] sm:$0xf]
        %v678 = vld [vmem:[%s375 + $0x24] sm:$0xf]
        %v679 = vld [vmem:[%s375 + $0x28] sm:$0xf]
        %v680 = vld [vmem:[%s375 + $0x2c] sm:$0xf]
        %v681 = vld [vmem:[%s375 + $0x30] sm:$0xf]
        %v682 = vld [vmem:[%s375 + $0x34] sm:$0xf]
        %v683 = vld [vmem:[%s375 + $0x38] sm:$0xf]
        %v684 = vld [vmem:[%s375 + $0x3c] sm:$0xf]
        %v701 = vunpack.c.l.b16 %v669
        %v702 = vunpack.c.l.b16 %v670
        %v703 = vunpack.c.l.b16 %v671
        %v704 = vunpack.c.l.b16 %v672
        %v705 = vunpack.c.l.b16 %v673
        %v706 = vunpack.c.l.b16 %v674
        %v707 = vunpack.c.l.b16 %v675
        %v708 = vunpack.c.l.b16 %v676
        %v709 = vunpack.c.l.b16 %v677
        %v710 = vunpack.c.l.b16 %v678
        %v711 = vunpack.c.l.b16 %v679
        %v712 = vunpack.c.l.b16 %v680
        %v713 = vunpack.c.l.b16 %v681
        %v714 = vunpack.c.l.b16 %v682
        %v715 = vunpack.c.l.b16 %v683
        %v716 = vunpack.c.l.b16 %v684
        %v717 = vpack.c.b16 %v702, %v701
        %v718 = vpack.c.b16 %v704, %v703
        %v719 = vpack.c.b16 %v706, %v705
        %v720 = vpack.c.b16 %v708, %v707
        %v721 = vpack.c.b16 %v710, %v709
        %v722 = vpack.c.b16 %v712, %v711
        %v723 = vpack.c.b16 %v714, %v713
        %v724 = vpack.c.b16 %v716, %v715
        %733 = vmatprep.subr.bf16.mxu0 0
        %734 = vmatpush1.bf16.msra.mxu0 %v717
        %735 = vmatprep.subr.bf16.mxu0 0
        %736 = vmatpush1.bf16.msra.mxu0 %v718
        %737 = vmatprep.subr.bf16.mxu0 0
        %738 = vmatpush1.bf16.msra.mxu0 %v719
        %739 = vmatprep.subr.bf16.mxu0 0
        %740 = vmatpush1.bf16.msra.mxu0 %v720
        %741 = vmatprep.subr.bf16.mxu0 0
        %742 = vmatpush1.bf16.msra.mxu0 %v721
        %743 = vmatprep.subr.bf16.mxu0 0
        %744 = vmatpush1.bf16.msra.mxu0 %v722
        %745 = vmatprep.subr.bf16.mxu0 0
        %746 = vmatpush1.bf16.msra.mxu0 %v723
        %747 = vmatprep.subr.bf16.mxu0 0
        %748 = vmatpush1.bf16.msra.mxu0 %v724
        %749 = vmatprep.subr.bf16.mxu0 0
        %750 = vmatpush1.bf16.msra.mxu0 0
        %751 = vmatprep.subr.bf16.mxu0 0
        %752 = vmatpush1.bf16.msra.mxu0 0
        %753 = vmatprep.subr.bf16.mxu0 0
        %754 = vmatpush1.bf16.msra.mxu0 0
        %755 = vmatprep.subr.bf16.mxu0 0
        %756 = vmatpush1.bf16.msra.mxu0 0
        %757 = vmatprep.subr.bf16.mxu0 0
        %758 = vmatpush1.bf16.msra.mxu0 0
        %759 = vmatprep.subr.bf16.mxu0 0
        %760 = vmatpush1.bf16.msra.mxu0 0
        %761 = vmatprep.subr.bf16.mxu0 0
        %762 = vmatpush1.bf16.msra.mxu0 0
        %763 = vmatprep.subr.bf16.mxu0 0
        %764 = vmatpush1.bf16.msra.mxu0 0
        %765 = vmatprep.mubr.bf16.mxu0 0
        %766 = vmatmul.mubr.bf16.gmra.mrb[0].mxu0 %v666
        %v767 = vpop.f32.mrb[0].mxu0
        %v768 = vadd.f32 0.0, %v767
        %v769 = vpop.f32.mrb[0].mxu0
        %v770 = vpop.f32.mrb[0].mxu0
        %v771 = vadd.f32 0.0, %v770
        %v772 = vpop.f32.mrb[0].mxu0
        %773 = vdwg.mxu0
        %v774 = vadd.f32 %v667, %v768
        %v775 = vadd.f32 %v668, %v771
        %776 = vst [vmem:[#allocation2] sm:$0xff] %v774
        %777 = vst [vmem:[#allocation2 + $0x8] sm:$0xff] %v775
        %p778 = scmp.eq.s32.totalorder %s31, 2
        // Predicated region
        $region73: #{tpu_custom_call.1} parent=43 // pred_check
          %p779 = pneg %p778
        $region74: #{tpu_custom_call.1} parent=43 // pred_check_branch
          %781 = sbr.rel (%p779) target = $region76
        $region75: #{tpu_custom_call.1} parent=43 // pred_region
          %v782 = vld [vmem:[#allocation2] sm:$0xff]
          %v783 = vld [vmem:[#allocation2 + $0x8] sm:$0xff]
          %v784 = vld [vmem:[#allocation12] sm:$0x1]
          %v786 = vlaneseq
          %v787 = vshrl.u32 %v786, 7
          %v788 = vsub.s32 0, %v787
          %v789 = vrot.slane %v784, %v788
          %v791 = vadd.f32 %v782, %v789
          %v792 = vadd.f32 %v783, %v789
          %v793 = vpack.c.bf16 %v792, %v791
          %v795 = vunpack.c.l.b16 %v793
          %v796 = vunpack.c.h.b16 %v793
          %v797 = vpack.c.b16 %v795, %v795
          %v798 = vpack.c.b16 %v796, %v796
          %801 = vst [vmem:[#allocation14] sm:$0xf] %v797
          %802 = vst [vmem:[#allocation14 + $0x4] sm:$0xf] %v798
        $region76: #{tpu_custom_call.1} parent=43 // pred_fallthru
          _
        // Predicated region
        $region77: #{tpu_custom_call.1} parent=43 // pred_check
          %p803 = pneg %p207
        $region78: #{tpu_custom_call.1} parent=43 // pred_check_branch
          %805 = sbr.rel (%p803) target = $region80
        $region79: #{tpu_custom_call.1} parent=43 // pred_region
          %s806 = smul.u32 2, %s30
          %s808 = ssub.s32 128, 128
          %809 = vsyncadd [#allocation5], %s808
          %s810 = smul.addr %s806, 64
          %s811 = scalar_lea.hbm %s6, %s810
          %s812 = sshll.u32 [#allocation14], 4
          %s813 = int_to_ptr.vmem [resolvable:$true] %s812
          %818 = dma.vmem_to_hbm [thread:$0]  %s813, 128, %s811, [#allocation5], 64, 64, 4
        $region80: #{tpu_custom_call.1} parent=43 // pred_fallthru
          _
        // Predicated region
        $region81: #{tpu_custom_call.1} parent=43 // pred_check
          %p819 = pneg %p207
        $region82: #{tpu_custom_call.1} parent=43 // pred_check_branch
          %821 = sbr.rel (%p819) target = $region84
        $region83: #{tpu_custom_call.1} parent=43 // pred_region
          %822 = dma.done [#allocation5], 128
        $region84: #{tpu_custom_call.1} parent=43 // pred_fallthru
          _
      $region44: #{tpu_custom_call.1} parent=5 // pred_fallthru
        _
      %p823 = scmp.le.s32.totalorder 2, %s21
      // Predicated region
      $region85: #{tpu_custom_call.1} parent=5 // pred_check
        %p824 = pneg %p823
      $region86: #{tpu_custom_call.1} parent=5 // pred_check_branch
        %826 = sbr.rel (%p824) target = $region88
      $region87: #{tpu_custom_call.1} parent=5 // pred_region
        %s827 = ssub.s32 %s21, 2
      $region88: #{tpu_custom_call.1} parent=5 // pred_fallthru
        _
    $region6: #{tpu_custom_call.1} parent=1 // loop_footer
      %s25 = sadd.s32 1, %s21
    $region7: #{tpu_custom_call.1} parent=1 // loop_footer_branch
      %20 = sbr.rel target = $region3
    $region8: #{tpu_custom_call.1} parent=1 // loop_exit
      _
    %828 = vsyncpa [#allocation4], 1
    %s829 = scalar_lea.sflag [#allocation4], 1
    %830 = vsyncpa %s829, 1
    %831 = vsyncpa [#allocation7], 1
    %s832 = scalar_lea.sflag [#allocation7], 1
    %833 = vsyncpa %s832, 1
    %834 = vsyncpa [#allocation10], 1
    %s835 = scalar_lea.sflag [#allocation10], 1
    %836 = vsyncpa %s835, 1
    %837 = vsyncpa [#allocation13], 1
    %838 = vsyncpa [#allocation5], 1
    %s839 = scalar_lea.sflag [#allocation5], 1
    %840 = vsyncpa %s839, 1

</llo_original>
